<compile_context>
chip_gen: v7x
topology: tpu7x:2x2x1
jax: 0.10.0
libtpu: 0.0.40
codegen_flags: <defaults>
</compile_context>

<pallas_src>
import functools

import jax
import jax.numpy as jnp
from jax import lax
from jax.experimental import pallas as pl
from jax.experimental.pallas import tpu as pltpu

_LANE = 128
_CHUNK = 512  # in-kernel lane sub-chunk; (32, 512) f32 activations fit in ~16 vregs


def _num_tensorcores():
    """Best-effort TensorCore count (v7x has 2); falls back to 1."""
    try:
        info = pltpu.get_tpu_info()
    except Exception:
        return 1
    for name in ("num_cores", "core_count", "num_tensorcores", "tensorcore_count"):
        v = getattr(info, name, None)
        if isinstance(v, int) and v > 0:
            return v
    return 1


def _ntf_kernel(xT_ref, w1_ref, w2_ref, w3_ref, o_ref, *, chunk, mxu_dtype):
    # xT_ref : (input_dim, tm)    f32       -- points on the 128-lane axis
    # w1_ref : (width, input_dim) f32       -- PyTorch nn.Linear (out, in) layout
    # w2_ref : (width, width)     mxu_dtype -- bf16 by default (MXU-native)
    # w3_ref : (out_dim, width)   mxu_dtype
    # o_ref  : (out_dim, tm)      f32
    input_dim = xT_ref.shape[0]
    tm = xT_ref.shape[1]
    w1 = w1_ref[...]
    w2 = w2_ref[...]
    w3 = w3_ref[...]
    n_chunks = tm // chunk

    def body(c, carry):
        off = pl.multiple_of(c * chunk, chunk)
        xT = xT_ref[:, pl.ds(off, chunk)]                          # (input_dim, chunk)

        # Layer 1: K=2 contraction as VPU broadcast-FMAs (f32, lane-dense result).
        h = w1[:, 0:1] * xT[0:1, :]
        for k in range(1, input_dim):
            h = h + w1[:, k:k + 1] * xT[k:k + 1, :]
        h = jnp.maximum(h, 0.0)                                    # ReLU (f32 VPU)

        # Layer 2: (width, width) @ (width, chunk) on the MXU, bf16 ops / f32 acc.
        h = jnp.dot(w2, h.astype(mxu_dtype), preferred_element_type=jnp.float32)
        h = jnp.maximum(h, 0.0)                                    # ReLU (f32 VPU)

        # Layer 3: (out_dim, width) @ (width, chunk); N stays on the lanes so the
        # clamp and the store are fully packed (no masked vst on a 3-wide axis).
        y = jnp.dot(w3, h.astype(mxu_dtype), preferred_element_type=jnp.float32)
        o_ref[:, pl.ds(off, chunk)] = jnp.clip(y, -0.95, 0.95).astype(o_ref.dtype)
        return carry

    lax.fori_loop(0, n_chunks, body, 0, unroll=True)


def neural_texture_field_apply_T(xT, w1, w2, w3, *, tm=8192, mxu_dtype=jnp.bfloat16):
    """Transposed (preferred, zero-copy) interface.

    xT : (input_dim, N) f32 query coordinates, points on the last axis.
    w1 : (width, input_dim), w2: (width, width), w3: (out_dim, width)
         -- PyTorch nn.Linear (out_features, in_features) layout, bias-free.
    Returns (out_dim, N) f32, clamped to [-0.95, 0.95].
    """
    input_dim, N = xT.shape
    width = w1.shape[0]
    out_dim = w3.shape[0]
    assert w1.shape == (width, input_dim)
    assert w2.shape == (width, width)
    assert w3.shape == (out_dim, width)

    # --- tile selection -----------------------------------------------------
    n_lanes = pl.cdiv(N, _LANE) * _LANE          # lane-aligned extent (no HBM pad)
    tm_eff = max(_LANE, min(int(tm), n_lanes))

    # v7x: 2 TensorCores share the grid via dimension_semantics=("parallel",);
    # give each core a few steps so tail imbalance amortizes.  On single-TC chips
    # (v5e/v6e) do not split -- it would only add per-step overhead.
    cores = _num_tensorcores()
    if cores > 1:
        min_steps = 2 * cores
        while pl.cdiv(n_lanes, tm_eff) < min_steps and tm_eff > _LANE:
            tm_eff = max(_LANE, tm_eff // 2)

    # Make the tile a multiple of the in-kernel sub-chunk so fori_loop divides it.
    if tm_eff >= _CHUNK:
        tm_eff = (tm_eff // _CHUNK) * _CHUNK
        chunk = _CHUNK
    else:
        tm_eff = pl.cdiv(tm_eff, _LANE) * _LANE
        chunk = tm_eff

    grid = (pl.cdiv(N, tm_eff),)

    # Weights for the MXU layers are pre-cast once (tiny arrays, smaller DMAs).
    w2c = w2.astype(mxu_dtype)
    w3c = w3.astype(mxu_dtype)

    yT = pl.pallas_call(
        functools.partial(_ntf_kernel, chunk=chunk, mxu_dtype=mxu_dtype),
        out_shape=jax.ShapeDtypeStruct((out_dim, N), xT.dtype),
        grid_spec=pltpu.PrefetchScalarGridSpec(
            num_scalar_prefetch=0,
            grid=grid,
            in_specs=[
                pl.BlockSpec((input_dim, tm_eff), lambda i: (0, i)),   # x^T tile
                pl.BlockSpec((width, input_dim), lambda i: (0, 0)),    # W1 (resident)
                pl.BlockSpec((width, width), lambda i: (0, 0)),        # W2 (resident)
                pl.BlockSpec((out_dim, width), lambda i: (0, 0)),      # W3 (resident)
            ],
            out_specs=pl.BlockSpec((out_dim, tm_eff), lambda i: (0, i)),
        ),
        compiler_params=pltpu.CompilerParams(
            dimension_semantics=("parallel",),
            # Explicit headroom for large tiles (v5e default scoped VMEM is 16 MiB;
            # 32 MiB fits within physical VMEM on v5e/v6e/v7x).
            vmem_limit_bytes=32 * 1024 * 1024,
        ),
    )(xT, w1, w2c, w3c)
    return yT


def neural_texture_field_forward(x, w1, w2, w3, *, tm=8192, mxu_dtype=jnp.bfloat16):
    """PyTorch-facing interface: x (N, input_dim) -> (N, out_dim), clamped.

    Prefer `neural_texture_field_apply_T` when the caller can keep the transposed
    (C, N) layout end-to-end; the two transposes here are the only extra HBM traffic.
    """
    yT = neural_texture_field_apply_T(x.T, w1, w2, w3, tm=tm, mxu_dtype=mxu_dtype)
    return yT.T


def _init_linear_weight(key, fan_out, fan_in):
    # PyTorch-Linear-like init: U(-1/sqrt(fan_in), 1/sqrt(fan_in)), (out, in) layout.
    bound = 1.0 / jnp.sqrt(jnp.float32(fan_in))
    return jax.random.uniform(key, (fan_out, fan_in), jnp.float32,
                              minval=-bound, maxval=bound)


if __name__ == "__main__":
    # Small, forward-consistent shapes: width=32, depth=3, input_dim=2, output_dim=3.
    input_dim = 2
    width = 32
    output_dim = 3

    key = jax.random.PRNGKey(0)
    kx, k1, k2, k3 = jax.random.split(key, 4)

    w1 = _init_linear_weight(k1, width, input_dim)      # (width, input_dim)
    w2 = _init_linear_weight(k2, width, width)          # (width, width)
    w3 = _init_linear_weight(k3, output_dim, width)     # (out_dim, width)

    def ref_forward(x):
        # Plain-JAX f32 version of the PyTorch forward:
        # Linear -> ReLU -> Linear -> ReLU -> Linear -> clamp, all bias-free.
        h = jnp.maximum(x @ w1.T, 0.0)
        h = jnp.maximum(h @ w2.T, 0.0)
        return jnp.clip(h @ w3.T, -0.95, 0.95)

    # Exercise both the exact-tile path (1024) and the ragged final-block path (1000).
    for N in (1024, 1000):
        xk = jax.random.fold_in(kx, N)
        x = jax.random.uniform(xk, (N, input_dim), jnp.float32, minval=-1.0, maxval=1.0)

        out = jax.block_until_ready(neural_texture_field_forward(x, w1, w2, w3))
        ref = ref_forward(x)

        assert out.shape == (N, output_dim)
        # bf16 MXU operands with f32 accumulation: ~1e-3 abs error vs the f32 reference
        # (visually negligible for a [-0.95, 0.95]-clamped texture).
        max_err = float(jnp.max(jnp.abs(out - ref)))
        assert max_err < 5e-2, max_err

    print("KERNEL_OK")
</pallas_src>

<mosaic_0001>
module attributes {stable_mosaic.version = 11 : i64} {
  func.func @_ntf_kernel(%arg0: i32, %arg1: memref<2x1024xf32, #tpu.memory_space<vmem>>, %arg2: memref<32x2xf32, #tpu.memory_space<vmem>>, %arg3: memref<32x32xbf16, #tpu.memory_space<vmem>>, %arg4: memref<3x32xbf16, #tpu.memory_space<vmem>>, %arg5: memref<3x1024xf32, #tpu.memory_space<vmem>>) attributes {dimension_semantics = [#tpu.dimension_semantics<parallel>], iteration_bounds = array<i64: 1>, scalar_prefetch = 0 : i64, scratch_operands = 0 : i64, tpu.core_type = #tpu.core_type<tc>, window_params = [{transform_indices = @transform_0, window_bounds = array<i64: 2, 1024>}, {pipeline_mode = #tpu.pipeline_mode<synchronous>, transform_indices = @transform_1, window_bounds = array<i64: 32, 2>}, {pipeline_mode = #tpu.pipeline_mode<synchronous>, transform_indices = @transform_2, window_bounds = array<i64: 32, 32>}, {pipeline_mode = #tpu.pipeline_mode<synchronous>, transform_indices = @transform_3, window_bounds = array<i64: 3, 32>}, {transform_indices = @transform_4, window_bounds = array<i64: 3, 1024>}]} {
    %c0 = arith.constant 0 : index
    %c0_0 = arith.constant 0 : index
    %0 = vector.load %arg2[%c0, %c0_0] : memref<32x2xf32, #tpu.memory_space<vmem>>, vector<32x2xf32>
    %c0_1 = arith.constant 0 : index
    %c0_2 = arith.constant 0 : index
    %1 = vector.load %arg3[%c0_1, %c0_2] : memref<32x32xbf16, #tpu.memory_space<vmem>>, vector<32x32xbf16>
    %c0_3 = arith.constant 0 : index
    %c0_4 = arith.constant 0 : index
    %2 = vector.load %arg4[%c0_3, %c0_4] : memref<3x32xbf16, #tpu.memory_space<vmem>>, vector<3x32xbf16>
    %c0_i32 = arith.constant 0 : i32
    %c512_i32 = arith.constant 512 : i32
    %3 = arith.muli %c0_i32, %c512_i32 : i32
    %4 = tpu.assume_multiple %3, 512 : i32
    %c0_5 = arith.constant 0 : index
    %5 = arith.index_cast %4 : i32 to index
    %6 = vector.load %arg1[%c0_5, %5] : memref<2x1024xf32, #tpu.memory_space<vmem>>, vector<2x512xf32>
    %7 = vector.extract_strided_slice %0 {offsets = [0, 0], sizes = [32, 1], strides = [1, 1]} : vector<32x2xf32> to vector<32x1xf32>
    %8 = vector.extract_strided_slice %6 {offsets = [0, 0], sizes = [1, 512], strides = [1, 1]} : vector<2x512xf32> to vector<1x512xf32>
    %9 = vector.broadcast %7 : vector<32x1xf32> to vector<32x512xf32>
    %10 = vector.broadcast %8 : vector<1x512xf32> to vector<32x512xf32>
    %11 = arith.mulf %9, %10 : vector<32x512xf32>
    %12 = vector.extract_strided_slice %0 {offsets = [0, 1], sizes = [32, 1], strides = [1, 1]} : vector<32x2xf32> to vector<32x1xf32>
    %13 = vector.extract_strided_slice %6 {offsets = [1, 0], sizes = [1, 512], strides = [1, 1]} : vector<2x512xf32> to vector<1x512xf32>
    %14 = vector.broadcast %12 : vector<32x1xf32> to vector<32x512xf32>
    %15 = vector.broadcast %13 : vector<1x512xf32> to vector<32x512xf32>
    %16 = arith.mulf %14, %15 : vector<32x512xf32>
    %17 = arith.addf %11, %16 : vector<32x512xf32>
    %cst = arith.constant 0.000000e+00 : f32
    %18 = vector.broadcast %cst : f32 to vector<32x512xf32>
    %19 = arith.maximumf %17, %18 : vector<32x512xf32>
    %20 = arith.truncf %19 : vector<32x512xf32> to vector<32x512xbf16>
    %cst_6 = arith.constant dense<0.000000e+00> : vector<32x512xf32>
    %21 = tpu.matmul %1, %20, %cst_6 {dimension_numbers = #tpu.dot_dimension_numbers<[1], [0], [0], [1], [0, 0, 1, 1], [], []>} : vector<32x32xbf16>, vector<32x512xbf16>, vector<32x512xf32> -> vector<32x512xf32>
    %cst_7 = arith.constant 0.000000e+00 : f32
    %22 = vector.broadcast %cst_7 : f32 to vector<32x512xf32>
    %23 = arith.maximumf %21, %22 : vector<32x512xf32>
    %24 = arith.truncf %23 : vector<32x512xf32> to vector<32x512xbf16>
    %cst_8 = arith.constant dense<0.000000e+00> : vector<3x512xf32>
    %25 = tpu.matmul %2, %24, %cst_8 {dimension_numbers = #tpu.dot_dimension_numbers<[1], [0], [0], [1], [0, 0, 1, 1], [], []>} : vector<3x32xbf16>, vector<32x512xbf16>, vector<3x512xf32> -> vector<3x512xf32>
    %cst_9 = arith.constant -0.949999988 : f32
    %cst_10 = arith.constant 0.949999988 : f32
    %26 = vector.broadcast %cst_9 : f32 to vector<3x512xf32>
    %27 = arith.maximumf %26, %25 : vector<3x512xf32>
    %28 = vector.broadcast %cst_10 : f32 to vector<3x512xf32>
    %29 = arith.minimumf %28, %27 : vector<3x512xf32>
    %c0_11 = arith.constant 0 : index
    %30 = arith.index_cast %4 : i32 to index
    %31 = vector.load %arg5[%c0_11, %30] : memref<3x1024xf32, #tpu.memory_space<vmem>>, vector<3x512xf32>
    tpu.vector_store %arg5[%c0_11, %30], %29 {strides = array<i32>} : memref<3x1024xf32, #tpu.memory_space<vmem>>, vector<3x512xf32>,
    %c1_i32 = arith.constant 1 : i32
    %c512_i32_12 = arith.constant 512 : i32
    %32 = arith.muli %c1_i32, %c512_i32_12 : i32
    %33 = tpu.assume_multiple %32, 512 : i32
    %c0_13 = arith.constant 0 : index
    %34 = arith.index_cast %33 : i32 to index
    %35 = vector.load %arg1[%c0_13, %34] : memref<2x1024xf32, #tpu.memory_space<vmem>>, vector<2x512xf32>
    %36 = vector.extract_strided_slice %0 {offsets = [0, 0], sizes = [32, 1], strides = [1, 1]} : vector<32x2xf32> to vector<32x1xf32>
    %37 = vector.extract_strided_slice %35 {offsets = [0, 0], sizes = [1, 512], strides = [1, 1]} : vector<2x512xf32> to vector<1x512xf32>
    %38 = vector.broadcast %36 : vector<32x1xf32> to vector<32x512xf32>
    %39 = vector.broadcast %37 : vector<1x512xf32> to vector<32x512xf32>
    %40 = arith.mulf %38, %39 : vector<32x512xf32>
    %41 = vector.extract_strided_slice %0 {offsets = [0, 1], sizes = [32, 1], strides = [1, 1]} : vector<32x2xf32> to vector<32x1xf32>
    %42 = vector.extract_strided_slice %35 {offsets = [1, 0], sizes = [1, 512], strides = [1, 1]} : vector<2x512xf32> to vector<1x512xf32>
    %43 = vector.broadcast %41 : vector<32x1xf32> to vector<32x512xf32>
    %44 = vector.broadcast %42 : vector<1x512xf32> to vector<32x512xf32>
    %45 = arith.mulf %43, %44 : vector<32x512xf32>
    %46 = arith.addf %40, %45 : vector<32x512xf32>
    %cst_14 = arith.constant 0.000000e+00 : f32
    %47 = vector.broadcast %cst_14 : f32 to vector<32x512xf32>
    %48 = arith.maximumf %46, %47 : vector<32x512xf32>
    %49 = arith.truncf %48 : vector<32x512xf32> to vector<32x512xbf16>
    %cst_15 = arith.constant dense<0.000000e+00> : vector<32x512xf32>
    %50 = tpu.matmul %1, %49, %cst_15 {dimension_numbers = #tpu.dot_dimension_numbers<[1], [0], [0], [1], [0, 0, 1, 1], [], []>} : vector<32x32xbf16>, vector<32x512xbf16>, vector<32x512xf32> -> vector<32x512xf32>
    %cst_16 = arith.constant 0.000000e+00 : f32
    %51 = vector.broadcast %cst_16 : f32 to vector<32x512xf32>
    %52 = arith.maximumf %50, %51 : vector<32x512xf32>
    %53 = arith.truncf %52 : vector<32x512xf32> to vector<32x512xbf16>
    %cst_17 = arith.constant dense<0.000000e+00> : vector<3x512xf32>
    %54 = tpu.matmul %2, %53, %cst_17 {dimension_numbers = #tpu.dot_dimension_numbers<[1], [0], [0], [1], [0, 0, 1, 1], [], []>} : vector<3x32xbf16>, vector<32x512xbf16>, vector<3x512xf32> -> vector<3x512xf32>
    %cst_18 = arith.constant -0.949999988 : f32
    %cst_19 = arith.constant 0.949999988 : f32
    %55 = vector.broadcast %cst_18 : f32 to vector<3x512xf32>
    %56 = arith.maximumf %55, %54 : vector<3x512xf32>
    %57 = vector.broadcast %cst_19 : f32 to vector<3x512xf32>
    %58 = arith.minimumf %57, %56 : vector<3x512xf32>
    %c0_20 = arith.constant 0 : index
    %59 = arith.index_cast %33 : i32 to index
    %60 = vector.load %arg5[%c0_20, %59] : memref<3x1024xf32, #tpu.memory_space<vmem>>, vector<3x512xf32>
    tpu.vector_store %arg5[%c0_20, %59], %58 {strides = array<i32>} : memref<3x1024xf32, #tpu.memory_space<vmem>>, vector<3x512xf32>,
    %c2_i32 = arith.constant 2 : i32
    return
  }
  func.func @transform_0(%arg0: i32) -> (i32, i32) {
    %c0_i32 = arith.constant 0 : i32
    %c0_i32_0 = arith.constant 0 : i32
    return %c0_i32, %arg0 : i32, i32
  }
  func.func @transform_1(%arg0: i32) -> (i32, i32) {
    %c0_i32 = arith.constant 0 : i32
    %c0_i32_0 = arith.constant 0 : i32
    %c0_i32_1 = arith.constant 0 : i32
    return %c0_i32, %c0_i32_0 : i32, i32
  }
  func.func @transform_2(%arg0: i32) -> (i32, i32) {
    %c0_i32 = arith.constant 0 : i32
    %c0_i32_0 = arith.constant 0 : i32
    %c0_i32_1 = arith.constant 0 : i32
    return %c0_i32, %c0_i32_0 : i32, i32
  }
  func.func @transform_3(%arg0: i32) -> (i32, i32) {
    %c0_i32 = arith.constant 0 : i32
    %c0_i32_0 = arith.constant 0 : i32
    %c0_i32_1 = arith.constant 0 : i32
    return %c0_i32, %c0_i32_0 : i32, i32
  }
  func.func @transform_4(%arg0: i32) -> (i32, i32) {
    %c0_i32 = arith.constant 0 : i32
    %c0_i32_0 = arith.constant 0 : i32
    return %c0_i32, %arg0 : i32, i32
  }
}

</mosaic_0001>

<llo_original>
// kernel: tpu_custom_call.1
$region0: #{tpu_custom_call.1}
  #allocation0 [shape = 'u32[]', space=smem, size = 0x4, offset = 0x4, fixed_abs, tag = 'smem constant byte address 0x4 - core index']
  #allocation1 [shape = 'u32[144,128]{1,0:T(1,128)}', space=vmem, size = 0x12000, scoped, tag = 'internal scratch']
  %s0 = inlined_call_operand.vmem [shape: f32[2,1024], index: 0, kind: input, shape index: {}]
  %s1 = inlined_call_operand.vmem [shape: f32[32,2], index: 1, kind: input, shape index: {}]
  %s2 = inlined_call_operand.vmem [shape: bf16[32,32], index: 2, kind: input, shape index: {}]
  %s3 = inlined_call_operand.vmem [shape: bf16[3,32], index: 3, kind: input, shape index: {}]
  %s4 = inlined_call_operand.hbm [shape: f32[3,1024], index: 4, kind: output, shape index: {}]
  %s5 = sld [smem:[#allocation0]]
  $region26: #{tpu_custom_call.1} parent=0
    _
  %s7 = ssub.s32 1, %s5
  %s8 = scalar_select 0, %s7, %s5
  $region1: #{tpu_custom_call.1} parent=0
    #allocation2 [shape = 'u8[16384]{0}', space=vmem, size = 0x4000, scoped, tag = 'output window, operand 0, single buffered']
    #allocation3 [shape = 's32[1]{0}', space=sflag, size = 0x4, scoped, tag = 'scoped memory for tpu_custom_call.1']
    %9 = vsyncpa [#allocation3], 0
    // Predicated region
    $region2: #{tpu_custom_call.1} parent=1 // pred_check
      _
    $region3: #{tpu_custom_call.1} parent=1 // pred_check_branch
      %11 = sbr.rel (0) target = $region5
    $region4: #{tpu_custom_call.1} parent=1 // pred_region
      _
    $region5: #{tpu_custom_call.1} parent=1 // pred_fallthru
      _
    // Predicated region
    $region6: #{tpu_custom_call.1} parent=1 // pred_check
      _
    $region7: #{tpu_custom_call.1} parent=1 // pred_check_branch
      %13 = sbr.rel (0) target = $region9
    $region8: #{tpu_custom_call.1} parent=1 // pred_region
      _
    $region9: #{tpu_custom_call.1} parent=1 // pred_fallthru
      _
    // Predicated region
    $region10: #{tpu_custom_call.1} parent=1 // pred_check
      _
    $region11: #{tpu_custom_call.1} parent=1 // pred_check_branch
      %15 = sbr.rel (0) target = $region13
    $region12: #{tpu_custom_call.1} parent=1 // pred_region
      _
    $region13: #{tpu_custom_call.1} parent=1 // pred_fallthru
      _
    // Predicated region
    $region14: #{tpu_custom_call.1} parent=1 // pred_check
      _
    $region15: #{tpu_custom_call.1} parent=1 // pred_check_branch
      %17 = sbr.rel (0) target = $region17
    $region16: #{tpu_custom_call.1} parent=1 // pred_region
      _
    $region17: #{tpu_custom_call.1} parent=1 // pred_fallthru
      _
    %v19 = vld [vmem:[%s1] sm:$0xff]
    %v20 = vld [vmem:[%s1 + $0x8] sm:$0xff]
    %v21 = vld [vmem:[%s1 + $0x10] sm:$0xff]
    %v22 = vld [vmem:[%s1 + $0x18] sm:$0xff]
    %v23 = vld [vmem:[%s2] sm:$0xf]
    %v24 = vld [vmem:[%s2 + $0x4] sm:$0xf]
    %v25 = vld [vmem:[%s2 + $0x8] sm:$0xf]
    %v26 = vld [vmem:[%s2 + $0xc] sm:$0xf]
    %v27 = vld [vmem:[%s3] sm:$0x3]
    %v28 = vld [vmem:[%s0] sm:$0xff]
    %30 = vset.pattern.permute.xlu0 0
    %31 = vperm.xlu0 %30, %v19
    %v32 = vpop.permute.xlu0 %31
    %35 = vset.pattern.permute.xlu0 0
    %36 = vperm.xlu0 %35, %v20
    %v37 = vpop.permute.xlu0 %36
    %40 = vset.pattern.permute.xlu0 0
    %41 = vperm.xlu0 %40, %v21
    %v42 = vpop.permute.xlu0 %41
    %45 = vset.pattern.permute.xlu0 0
    %46 = vperm.xlu0 %45, %v22
    %v47 = vpop.permute.xlu0 %46
    %v50 = vlaneseq
    %v51 = vshrl.u32 %v50, 7
    %v52 = vsub.s32 0, %v51
    %v53 = vrot.slane %v28, %v52
    %v54 = vlaneseq
    %v55 = vshrl.u32 %v54, 7
    %v56 = vsub.s32 2, %v55
    %v57 = vrot.slane %v28, %v56
    %v58 = vlaneseq
    %v59 = vshrl.u32 %v58, 7
    %v60 = vsub.s32 4, %v59
    %v61 = vrot.slane %v28, %v60
    %v62 = vlaneseq
    %v63 = vshrl.u32 %v62, 7
    %v64 = vsub.s32 6, %v63
    %v65 = vrot.slane %v28, %v64
    %v70 = vlaneseq
    %v71 = vshrl.u32 %v70, 7
    %v72 = vsub.s32 0, %v71
    %v73 = vrot.slane %v53, %v72
    %v74 = vlaneseq
    %v75 = vshrl.u32 %v74, 7
    %v76 = vsub.s32 0, %v75
    %v77 = vrot.slane %v57, %v76
    %v78 = vlaneseq
    %v79 = vshrl.u32 %v78, 7
    %v80 = vsub.s32 0, %v79
    %v81 = vrot.slane %v61, %v80
    %v82 = vlaneseq
    %v83 = vshrl.u32 %v82, 7
    %v84 = vsub.s32 0, %v83
    %v85 = vrot.slane %v65, %v84
    %v86 = vmul.f32 %v32, %v73
    %v87 = vmul.f32 %v32, %v77
    %v88 = vmul.f32 %v32, %v81
    %v89 = vmul.f32 %v32, %v85
    %v90 = vmul.f32 %v37, %v73
    %v91 = vmul.f32 %v37, %v77
    %v92 = vmul.f32 %v37, %v81
    %v93 = vmul.f32 %v37, %v85
    %v94 = vmul.f32 %v42, %v73
    %v95 = vmul.f32 %v42, %v77
    %v96 = vmul.f32 %v42, %v81
    %v97 = vmul.f32 %v42, %v85
    %v98 = vmul.f32 %v47, %v73
    %v99 = vmul.f32 %v47, %v77
    %v100 = vmul.f32 %v47, %v81
    %v101 = vmul.f32 %v47, %v85
    %102 = vset.pattern.permute.xlu0 1
    %103 = vperm.xlu0 %102, %v19
    %v104 = vpop.permute.xlu0 %103
    %106 = vset.pattern.permute.xlu0 1
    %107 = vperm.xlu0 %106, %v20
    %v108 = vpop.permute.xlu0 %107
    %110 = vset.pattern.permute.xlu0 1
    %111 = vperm.xlu0 %110, %v21
    %v112 = vpop.permute.xlu0 %111
    %114 = vset.pattern.permute.xlu0 1
    %115 = vperm.xlu0 %114, %v22
    %v116 = vpop.permute.xlu0 %115
    %v118 = vlaneseq
    %v119 = vshrl.u32 %v118, 7
    %v120 = vsub.s32 1, %v119
    %v121 = vrot.slane %v28, %v120
    %v122 = vlaneseq
    %v123 = vshrl.u32 %v122, 7
    %v124 = vsub.s32 3, %v123
    %v125 = vrot.slane %v28, %v124
    %v126 = vlaneseq
    %v127 = vshrl.u32 %v126, 7
    %v128 = vsub.s32 5, %v127
    %v129 = vrot.slane %v28, %v128
    %v130 = vlaneseq
    %v131 = vshrl.u32 %v130, 7
    %v132 = vsub.s32 7, %v131
    %v133 = vrot.slane %v28, %v132
    %v138 = vlaneseq
    %v139 = vshrl.u32 %v138, 7
    %v140 = vsub.s32 1, %v139
    %v141 = vrot.slane %v121, %v140
    %v142 = vlaneseq
    %v143 = vshrl.u32 %v142, 7
    %v144 = vsub.s32 1, %v143
    %v145 = vrot.slane %v125, %v144
    %v146 = vlaneseq
    %v147 = vshrl.u32 %v146, 7
    %v148 = vsub.s32 1, %v147
    %v149 = vrot.slane %v129, %v148
    %v150 = vlaneseq
    %v151 = vshrl.u32 %v150, 7
    %v152 = vsub.s32 1, %v151
    %v153 = vrot.slane %v133, %v152
    %v154 = vmul.f32 %v104, %v141
    %v155 = vmul.f32 %v104, %v145
    %v156 = vmul.f32 %v104, %v149
    %v157 = vmul.f32 %v104, %v153
    %v158 = vmul.f32 %v108, %v141
    %v159 = vmul.f32 %v108, %v145
    %v160 = vmul.f32 %v108, %v149
    %v161 = vmul.f32 %v108, %v153
    %v162 = vmul.f32 %v112, %v141
    %v163 = vmul.f32 %v112, %v145
    %v164 = vmul.f32 %v112, %v149
    %v165 = vmul.f32 %v112, %v153
    %v166 = vmul.f32 %v116, %v141
    %v167 = vmul.f32 %v116, %v145
    %v168 = vmul.f32 %v116, %v149
    %v169 = vmul.f32 %v116, %v153
    %v170 = vadd.f32 %v86, %v154
    %v171 = vadd.f32 %v87, %v155
    %v172 = vadd.f32 %v88, %v156
    %v173 = vadd.f32 %v89, %v157
    %v174 = vadd.f32 %v90, %v158
    %v175 = vadd.f32 %v91, %v159
    %v176 = vadd.f32 %v92, %v160
    %v177 = vadd.f32 %v93, %v161
    %v178 = vadd.f32 %v94, %v162
    %v179 = vadd.f32 %v95, %v163
    %v180 = vadd.f32 %v96, %v164
    %v181 = vadd.f32 %v97, %v165
    %v182 = vadd.f32 %v98, %v166
    %v183 = vadd.f32 %v99, %v167
    %v184 = vadd.f32 %v100, %v168
    %v185 = vadd.f32 %v101, %v169
    %v186 = vmax.f32 %v170, 0.0
    %v187 = vmax.f32 %v171, 0.0
    %v188 = vmax.f32 %v172, 0.0
    %v189 = vmax.f32 %v173, 0.0
    %v190 = vmax.f32 %v174, 0.0
    %v191 = vmax.f32 %v175, 0.0
    %v192 = vmax.f32 %v176, 0.0
    %v193 = vmax.f32 %v177, 0.0
    %v194 = vmax.f32 %v178, 0.0
    %v195 = vmax.f32 %v179, 0.0
    %v196 = vmax.f32 %v180, 0.0
    %v197 = vmax.f32 %v181, 0.0
    %v198 = vmax.f32 %v182, 0.0
    %v199 = vmax.f32 %v183, 0.0
    %v200 = vmax.f32 %v184, 0.0
    %v201 = vmax.f32 %v185, 0.0
    %v202 = vpack.c.bf16 %v190, %v186
    %v203 = vpack.c.bf16 %v191, %v187
    %v204 = vpack.c.bf16 %v192, %v188
    %v205 = vpack.c.bf16 %v193, %v189
    %v206 = vpack.c.bf16 %v198, %v194
    %v207 = vpack.c.bf16 %v199, %v195
    %v208 = vpack.c.bf16 %v200, %v196
    %v209 = vpack.c.bf16 %v201, %v197
    %v214 = vunpack.c.l.b16 %v23
    %v215 = vunpack.c.l.b16 %v24
    %v216 = vunpack.c.l.b16 %v25
    %v217 = vunpack.c.l.b16 %v26
    %v218 = vpack.c.b16 %v215, %v214
    %v219 = vpack.c.b16 %v217, %v216
    %vm220 = vcmask 261120
    %v222 = vsel %vm220, %v218, 0
    %v225 = vsel %vm220, %v219, 0
    %227 = vmatprep.subr.bf16.mxu0 %v203
    %228 = vmatpush1.bf16.msra.mxu0 %v202
    %229 = vmatprep.subr.bf16.mxu0 %v207
    %230 = vmatpush1.bf16.msra.mxu0 %v206
    %231 = vmatprep.subr.bf16.mxu0 0
    %232 = vmatpush1.bf16.msra.mxu0 0
    %233 = vmatprep.subr.bf16.mxu0 0
    %234 = vmatpush1.bf16.msra.mxu0 0
    %235 = vmatprep.subr.bf16.mxu0 0
    %236 = vmatpush1.bf16.msra.mxu0 0
    %237 = vmatprep.subr.bf16.mxu0 0
    %238 = vmatpush1.bf16.msra.mxu0 0
    %239 = vmatprep.subr.bf16.mxu0 0
    %240 = vmatpush1.bf16.msra.mxu0 0
    %241 = vmatprep.subr.bf16.mxu0 0
    %242 = vmatpush1.bf16.msra.mxu0 0
    %243 = vmatprep.subr.bf16.mxu0 0
    %244 = vmatpush1.bf16.msra.mxu0 0
    %245 = vmatprep.subr.bf16.mxu0 0
    %246 = vmatpush1.bf16.msra.mxu0 0
    %247 = vmatprep.subr.bf16.mxu0 0
    %248 = vmatpush1.bf16.msra.mxu0 0
    %249 = vmatprep.subr.bf16.mxu0 0
    %250 = vmatpush1.bf16.msra.mxu0 0
    %251 = vmatprep.subr.bf16.mxu0 0
    %252 = vmatpush1.bf16.msra.mxu0 0
    %253 = vmatprep.subr.bf16.mxu0 0
    %254 = vmatpush1.bf16.msra.mxu0 0
    %255 = vmatprep.subr.bf16.mxu0 0
    %256 = vmatpush1.bf16.msra.mxu0 0
    %257 = vmatprep.subr.bf16.mxu0 0
    %258 = vmatpush1.bf16.msra.mxu0 0
    %259 = vmatprep.mubr.bf16.mxu0 0
    %260 = vmatmul.mubr.bf16.gmra.mrb[0].mxu0 %v222
    %v261 = vpop.f32.mrb[0].mxu0
    %v262 = vadd.f32 0.0, %v261
    %v263 = vpop.f32.mrb[0].mxu0
    %v264 = vadd.f32 0.0, %v263
    %v265 = vpop.f32.mrb[0].mxu0
    %v266 = vadd.f32 0.0, %v265
    %v267 = vpop.f32.mrb[0].mxu0
    %v268 = vadd.f32 0.0, %v267
    %269 = vmatprep.mubr.bf16.mxu0 0
    %270 = vmatmul.mubr.bf16.gmra.mrb[0].mxu0 %v225
    %v271 = vpop.f32.mrb[0].mxu0
    %v272 = vadd.f32 0.0, %v271
    %v273 = vpop.f32.mrb[0].mxu0
    %v274 = vadd.f32 0.0, %v273
    %v275 = vpop.f32.mrb[0].mxu0
    %v276 = vadd.f32 0.0, %v275
    %v277 = vpop.f32.mrb[0].mxu0
    %v278 = vadd.f32 0.0, %v277
    %279 = vdwg.mxu0
    %280 = vmatprep.subr.bf16.mxu0 %v205
    %281 = vmatpush1.bf16.msra.mxu0 %v204
    %282 = vmatprep.subr.bf16.mxu0 %v209
    %283 = vmatpush1.bf16.msra.mxu0 %v208
    %284 = vmatprep.subr.bf16.mxu0 0
    %285 = vmatpush1.bf16.msra.mxu0 0
    %286 = vmatprep.subr.bf16.mxu0 0
    %287 = vmatpush1.bf16.msra.mxu0 0
    %288 = vmatprep.subr.bf16.mxu0 0
    %289 = vmatpush1.bf16.msra.mxu0 0
    %290 = vmatprep.subr.bf16.mxu0 0
    %291 = vmatpush1.bf16.msra.mxu0 0
    %292 = vmatprep.subr.bf16.mxu0 0
    %293 = vmatpush1.bf16.msra.mxu0 0
    %294 = vmatprep.subr.bf16.mxu0 0
    %295 = vmatpush1.bf16.msra.mxu0 0
    %296 = vmatprep.subr.bf16.mxu0 0
    %297 = vmatpush1.bf16.msra.mxu0 0
    %298 = vmatprep.subr.bf16.mxu0 0
    %299 = vmatpush1.bf16.msra.mxu0 0
    %300 = vmatprep.subr.bf16.mxu0 0
    %301 = vmatpush1.bf16.msra.mxu0 0
    %302 = vmatprep.subr.bf16.mxu0 0
    %303 = vmatpush1.bf16.msra.mxu0 0
    %304 = vmatprep.subr.bf16.mxu0 0
    %305 = vmatpush1.bf16.msra.mxu0 0
    %306 = vmatprep.subr.bf16.mxu0 0
    %307 = vmatpush1.bf16.msra.mxu0 0
    %308 = vmatprep.subr.bf16.mxu0 0
    %309 = vmatpush1.bf16.msra.mxu0 0
    %310 = vmatprep.subr.bf16.mxu0 0
    %311 = vmatpush1.bf16.msra.mxu0 0
    %312 = vmatprep.mubr.bf16.mxu0 0
    %313 = vmatmul.mubr.bf16.gmra.mrb[0].mxu0 %v222
    %v314 = vpop.f32.mrb[0].mxu0
    %v315 = vadd.f32 0.0, %v314
    %v316 = vpop.f32.mrb[0].mxu0
    %v317 = vadd.f32 0.0, %v316
    %v318 = vpop.f32.mrb[0].mxu0
    %v319 = vadd.f32 0.0, %v318
    %v320 = vpop.f32.mrb[0].mxu0
    %v321 = vadd.f32 0.0, %v320
    %322 = vmatprep.mubr.bf16.mxu0 0
    %323 = vmatmul.mubr.bf16.gmra.mrb[0].mxu0 %v225
    %v324 = vpop.f32.mrb[0].mxu0
    %v325 = vadd.f32 0.0, %v324
    %v326 = vpop.f32.mrb[0].mxu0
    %v327 = vadd.f32 0.0, %v326
    %v328 = vpop.f32.mrb[0].mxu0
    %v329 = vadd.f32 0.0, %v328
    %v330 = vpop.f32.mrb[0].mxu0
    %v331 = vadd.f32 0.0, %v330
    %332 = vdwg.mxu0
    %v333 = vmax.f32 %v262, 0.0
    %v334 = vmax.f32 %v264, 0.0
    %v335 = vmax.f32 %v315, 0.0
    %v336 = vmax.f32 %v317, 0.0
    %v337 = vmax.f32 %v266, 0.0
    %v338 = vmax.f32 %v268, 0.0
    %v339 = vmax.f32 %v319, 0.0
    %v340 = vmax.f32 %v321, 0.0
    %v341 = vmax.f32 %v272, 0.0
    %v342 = vmax.f32 %v274, 0.0
    %v343 = vmax.f32 %v325, 0.0
    %v344 = vmax.f32 %v327, 0.0
    %v345 = vmax.f32 %v276, 0.0
    %v346 = vmax.f32 %v278, 0.0
    %v347 = vmax.f32 %v329, 0.0
    %v348 = vmax.f32 %v331, 0.0
    %v349 = vpack.c.bf16 %v337, %v333
    %v350 = vpack.c.bf16 %v338, %v334
    %v351 = vpack.c.bf16 %v339, %v335
    %v352 = vpack.c.bf16 %v340, %v336
    %v353 = vpack.c.bf16 %v345, %v341
    %v354 = vpack.c.bf16 %v346, %v342
    %v355 = vpack.c.bf16 %v347, %v343
    %v356 = vpack.c.bf16 %v348, %v344
    %v358 = vsel %vm220, %v27, 0
    %360 = vmatprep.subr.bf16.mxu0 %v350
    %361 = vmatpush1.bf16.msra.mxu0 %v349
    %362 = vmatprep.subr.bf16.mxu0 %v354
    %363 = vmatpush1.bf16.msra.mxu0 %v353
    %364 = vmatprep.subr.bf16.mxu0 0
    %365 = vmatpush1.bf16.msra.mxu0 0
    %366 = vmatprep.subr.bf16.mxu0 0
    %367 = vmatpush1.bf16.msra.mxu0 0
    %368 = vmatprep.subr.bf16.mxu0 0
    %369 = vmatpush1.bf16.msra.mxu0 0
    %370 = vmatprep.subr.bf16.mxu0 0
    %371 = vmatpush1.bf16.msra.mxu0 0
    %372 = vmatprep.subr.bf16.mxu0 0
    %373 = vmatpush1.bf16.msra.mxu0 0
    %374 = vmatprep.subr.bf16.mxu0 0
    %375 = vmatpush1.bf16.msra.mxu0 0
    %376 = vmatprep.subr.bf16.mxu0 0
    %377 = vmatpush1.bf16.msra.mxu0 0
    %378 = vmatprep.subr.bf16.mxu0 0
    %379 = vmatpush1.bf16.msra.mxu0 0
    %380 = vmatprep.subr.bf16.mxu0 0
    %381 = vmatpush1.bf16.msra.mxu0 0
    %382 = vmatprep.subr.bf16.mxu0 0
    %383 = vmatpush1.bf16.msra.mxu0 0
    %384 = vmatprep.subr.bf16.mxu0 0
    %385 = vmatpush1.bf16.msra.mxu0 0
    %386 = vmatprep.subr.bf16.mxu0 0
    %387 = vmatpush1.bf16.msra.mxu0 0
    %388 = vmatprep.subr.bf16.mxu0 0
    %389 = vmatpush1.bf16.msra.mxu0 0
    %390 = vmatprep.subr.bf16.mxu0 0
    %391 = vmatpush1.bf16.msra.mxu0 0
    %392 = vmatprep.mubr.bf16.mxu0 0
    %393 = vmatmul.mubr.bf16.gmra.mrb[0].mxu0 %v358
    %v394 = vpop.f32.mrb[0].mxu0
    %v395 = vadd.f32 0.0, %v394
    %v396 = vpop.f32.mrb[0].mxu0
    %v397 = vadd.f32 0.0, %v396
    %v398 = vpop.f32.mrb[0].mxu0
    %v399 = vpop.f32.mrb[0].mxu0
    %400 = vdwg.mxu0
    %401 = vmatprep.subr.bf16.mxu0 %v352
    %402 = vmatpush1.bf16.msra.mxu0 %v351
    %403 = vmatprep.subr.bf16.mxu0 %v356
    %404 = vmatpush1.bf16.msra.mxu0 %v355
    %405 = vmatprep.subr.bf16.mxu0 0
    %406 = vmatpush1.bf16.msra.mxu0 0
    %407 = vmatprep.subr.bf16.mxu0 0
    %408 = vmatpush1.bf16.msra.mxu0 0
    %409 = vmatprep.subr.bf16.mxu0 0
    %410 = vmatpush1.bf16.msra.mxu0 0
    %411 = vmatprep.subr.bf16.mxu0 0
    %412 = vmatpush1.bf16.msra.mxu0 0
    %413 = vmatprep.subr.bf16.mxu0 0
    %414 = vmatpush1.bf16.msra.mxu0 0
    %415 = vmatprep.subr.bf16.mxu0 0
    %416 = vmatpush1.bf16.msra.mxu0 0
    %417 = vmatprep.subr.bf16.mxu0 0
    %418 = vmatpush1.bf16.msra.mxu0 0
    %419 = vmatprep.subr.bf16.mxu0 0
    %420 = vmatpush1.bf16.msra.mxu0 0
    %421 = vmatprep.subr.bf16.mxu0 0
    %422 = vmatpush1.bf16.msra.mxu0 0
    %423 = vmatprep.subr.bf16.mxu0 0
    %424 = vmatpush1.bf16.msra.mxu0 0
    %425 = vmatprep.subr.bf16.mxu0 0
    %426 = vmatpush1.bf16.msra.mxu0 0
    %427 = vmatprep.subr.bf16.mxu0 0
    %428 = vmatpush1.bf16.msra.mxu0 0
    %429 = vmatprep.subr.bf16.mxu0 0
    %430 = vmatpush1.bf16.msra.mxu0 0
    %431 = vmatprep.subr.bf16.mxu0 0
    %432 = vmatpush1.bf16.msra.mxu0 0
    %433 = vmatprep.mubr.bf16.mxu0 0
    %434 = vmatmul.mubr.bf16.gmra.mrb[0].mxu0 %v358
    %v435 = vpop.f32.mrb[0].mxu0
    %v436 = vadd.f32 0.0, %v435
    %v437 = vpop.f32.mrb[0].mxu0
    %v438 = vadd.f32 0.0, %v437
    %v439 = vpop.f32.mrb[0].mxu0
    %v440 = vpop.f32.mrb[0].mxu0
    %441 = vdwg.mxu0
    %v442 = vmax.f32 %v395, -0.95
    %v443 = vmax.f32 %v397, -0.95
    %v444 = vmax.f32 %v436, -0.95
    %v445 = vmax.f32 %v438, -0.95
    %v446 = vmin.f32 %v442, 0.95
    %v447 = vmin.f32 %v443, 0.95
    %v448 = vmin.f32 %v444, 0.95
    %v449 = vmin.f32 %v445, 0.95
    %v454 = vcombine.low %v446, %v447
    %v455 = vcombine.low %v448, %v449
    %458 = vst [vmem:[#allocation2] sm:$0x77] %v454
    %459 = vst [vmem:[#allocation2 + $0x8] sm:$0x77] %v455
    %s460 = scalar_lea.vmem %s0, 8
    %v461 = vld [vmem:[%s460] sm:$0xff]
    %v463 = vlaneseq
    %v464 = vshrl.u32 %v463, 7
    %v465 = vsub.s32 0, %v464
    %v466 = vrot.slane %v461, %v465
    %v467 = vlaneseq
    %v468 = vshrl.u32 %v467, 7
    %v469 = vsub.s32 2, %v468
    %v470 = vrot.slane %v461, %v469
    %v471 = vlaneseq
    %v472 = vshrl.u32 %v471, 7
    %v473 = vsub.s32 4, %v472
    %v474 = vrot.slane %v461, %v473
    %v475 = vlaneseq
    %v476 = vshrl.u32 %v475, 7
    %v477 = vsub.s32 6, %v476
    %v478 = vrot.slane %v461, %v477
    %v483 = vlaneseq
    %v484 = vshrl.u32 %v483, 7
    %v485 = vsub.s32 0, %v484
    %v486 = vrot.slane %v466, %v485
    %v487 = vlaneseq
    %v488 = vshrl.u32 %v487, 7
    %v489 = vsub.s32 0, %v488
    %v490 = vrot.slane %v470, %v489
    %v491 = vlaneseq
    %v492 = vshrl.u32 %v491, 7
    %v493 = vsub.s32 0, %v492
    %v494 = vrot.slane %v474, %v493
    %v495 = vlaneseq
    %v496 = vshrl.u32 %v495, 7
    %v497 = vsub.s32 0, %v496
    %v498 = vrot.slane %v478, %v497
    %v499 = vmul.f32 %v32, %v486
    %v500 = vmul.f32 %v32, %v490
    %v501 = vmul.f32 %v32, %v494
    %v502 = vmul.f32 %v32, %v498
    %v503 = vmul.f32 %v37, %v486
    %v504 = vmul.f32 %v37, %v490
    %v505 = vmul.f32 %v37, %v494
    %v506 = vmul.f32 %v37, %v498
    %v507 = vmul.f32 %v42, %v486
    %v508 = vmul.f32 %v42, %v490
    %v509 = vmul.f32 %v42, %v494
    %v510 = vmul.f32 %v42, %v498
    %v511 = vmul.f32 %v47, %v486
    %v512 = vmul.f32 %v47, %v490
    %v513 = vmul.f32 %v47, %v494
    %v514 = vmul.f32 %v47, %v498
    %v515 = vlaneseq
    %v516 = vshrl.u32 %v515, 7
    %v517 = vsub.s32 1, %v516
    %v518 = vrot.slane %v461, %v517
    %v519 = vlaneseq
    %v520 = vshrl.u32 %v519, 7
    %v521 = vsub.s32 3, %v520
    %v522 = vrot.slane %v461, %v521
    %v523 = vlaneseq
    %v524 = vshrl.u32 %v523, 7
    %v525 = vsub.s32 5, %v524
    %v526 = vrot.slane %v461, %v525
    %v527 = vlaneseq
    %v528 = vshrl.u32 %v527, 7
    %v529 = vsub.s32 7, %v528
    %v530 = vrot.slane %v461, %v529
    %v535 = vlaneseq
    %v536 = vshrl.u32 %v535, 7
    %v537 = vsub.s32 1, %v536
    %v538 = vrot.slane %v518, %v537
    %v539 = vlaneseq
    %v540 = vshrl.u32 %v539, 7
    %v541 = vsub.s32 1, %v540
    %v542 = vrot.slane %v522, %v541
    %v543 = vlaneseq
    %v544 = vshrl.u32 %v543, 7
    %v545 = vsub.s32 1, %v544
    %v546 = vrot.slane %v526, %v545
    %v547 = vlaneseq
    %v548 = vshrl.u32 %v547, 7
    %v549 = vsub.s32 1, %v548
    %v550 = vrot.slane %v530, %v549
    %v551 = vmul.f32 %v104, %v538
    %v552 = vmul.f32 %v104, %v542
    %v553 = vmul.f32 %v104, %v546
    %v554 = vmul.f32 %v104, %v550
    %v555 = vmul.f32 %v108, %v538
    %v556 = vmul.f32 %v108, %v542
    %v557 = vmul.f32 %v108, %v546
    %v558 = vmul.f32 %v108, %v550
    %v559 = vmul.f32 %v112, %v538
    %v560 = vmul.f32 %v112, %v542
    %v561 = vmul.f32 %v112, %v546
    %v562 = vmul.f32 %v112, %v550
    %v563 = vmul.f32 %v116, %v538
    %v564 = vmul.f32 %v116, %v542
    %v565 = vmul.f32 %v116, %v546
    %v566 = vmul.f32 %v116, %v550
    %v567 = vadd.f32 %v499, %v551
    %v568 = vadd.f32 %v500, %v552
    %v569 = vadd.f32 %v501, %v553
    %v570 = vadd.f32 %v502, %v554
    %v571 = vadd.f32 %v503, %v555
    %v572 = vadd.f32 %v504, %v556
    %v573 = vadd.f32 %v505, %v557
    %v574 = vadd.f32 %v506, %v558
    %v575 = vadd.f32 %v507, %v559
    %v576 = vadd.f32 %v508, %v560
    %v577 = vadd.f32 %v509, %v561
    %v578 = vadd.f32 %v510, %v562
    %v579 = vadd.f32 %v511, %v563
    %v580 = vadd.f32 %v512, %v564
    %v581 = vadd.f32 %v513, %v565
    %v582 = vadd.f32 %v514, %v566
    %v583 = vmax.f32 %v567, 0.0
    %v584 = vmax.f32 %v568, 0.0
    %v585 = vmax.f32 %v569, 0.0
    %v586 = vmax.f32 %v570, 0.0
    %v587 = vmax.f32 %v571, 0.0
    %v588 = vmax.f32 %v572, 0.0
    %v589 = vmax.f32 %v573, 0.0
    %v590 = vmax.f32 %v574, 0.0
    %v591 = vmax.f32 %v575, 0.0
    %v592 = vmax.f32 %v576, 0.0
    %v593 = vmax.f32 %v577, 0.0
    %v594 = vmax.f32 %v578, 0.0
    %v595 = vmax.f32 %v579, 0.0
    %v596 = vmax.f32 %v580, 0.0
    %v597 = vmax.f32 %v581, 0.0
    %v598 = vmax.f32 %v582, 0.0
    %v599 = vpack.c.bf16 %v587, %v583
    %v600 = vpack.c.bf16 %v588, %v584
    %v601 = vpack.c.bf16 %v589, %v585
    %v602 = vpack.c.bf16 %v590, %v586
    %v603 = vpack.c.bf16 %v595, %v591
    %v604 = vpack.c.bf16 %v596, %v592
    %v605 = vpack.c.bf16 %v597, %v593
    %v606 = vpack.c.bf16 %v598, %v594
    %607 = vmatprep.subr.bf16.mxu0 %v600
    %608 = vmatpush1.bf16.msra.mxu0 %v599
    %609 = vmatprep.subr.bf16.mxu0 %v604
    %610 = vmatpush1.bf16.msra.mxu0 %v603
    %611 = vmatprep.subr.bf16.mxu0 0
    %612 = vmatpush1.bf16.msra.mxu0 0
    %613 = vmatprep.subr.bf16.mxu0 0
    %614 = vmatpush1.bf16.msra.mxu0 0
    %615 = vmatprep.subr.bf16.mxu0 0
    %616 = vmatpush1.bf16.msra.mxu0 0
    %617 = vmatprep.subr.bf16.mxu0 0
    %618 = vmatpush1.bf16.msra.mxu0 0
    %619 = vmatprep.subr.bf16.mxu0 0
    %620 = vmatpush1.bf16.msra.mxu0 0
    %621 = vmatprep.subr.bf16.mxu0 0
    %622 = vmatpush1.bf16.msra.mxu0 0
    %623 = vmatprep.subr.bf16.mxu0 0
    %624 = vmatpush1.bf16.msra.mxu0 0
    %625 = vmatprep.subr.bf16.mxu0 0
    %626 = vmatpush1.bf16.msra.mxu0 0
    %627 = vmatprep.subr.bf16.mxu0 0
    %628 = vmatpush1.bf16.msra.mxu0 0
    %629 = vmatprep.subr.bf16.mxu0 0
    %630 = vmatpush1.bf16.msra.mxu0 0
    %631 = vmatprep.subr.bf16.mxu0 0
    %632 = vmatpush1.bf16.msra.mxu0 0
    %633 = vmatprep.subr.bf16.mxu0 0
    %634 = vmatpush1.bf16.msra.mxu0 0
    %635 = vmatprep.subr.bf16.mxu0 0
    %636 = vmatpush1.bf16.msra.mxu0 0
    %637 = vmatprep.subr.bf16.mxu0 0
    %638 = vmatpush1.bf16.msra.mxu0 0
    %639 = vmatprep.mubr.bf16.mxu0 0
    %640 = vmatmul.mubr.bf16.gmra.mrb[0].mxu0 %v222
    %v641 = vpop.f32.mrb[0].mxu0
    %v642 = vadd.f32 0.0, %v641
    %v643 = vpop.f32.mrb[0].mxu0
    %v644 = vadd.f32 0.0, %v643
    %v645 = vpop.f32.mrb[0].mxu0
    %v646 = vadd.f32 0.0, %v645
    %v647 = vpop.f32.mrb[0].mxu0
    %v648 = vadd.f32 0.0, %v647
    %649 = vmatprep.mubr.bf16.mxu0 0
    %650 = vmatmul.mubr.bf16.gmra.mrb[0].mxu0 %v225
    %v651 = vpop.f32.mrb[0].mxu0
    %v652 = vadd.f32 0.0, %v651
    %v653 = vpop.f32.mrb[0].mxu0
    %v654 = vadd.f32 0.0, %v653
    %v655 = vpop.f32.mrb[0].mxu0
    %v656 = vadd.f32 0.0, %v655
    %v657 = vpop.f32.mrb[0].mxu0
    %v658 = vadd.f32 0.0, %v657
    %659 = vdwg.mxu0
    %660 = vmatprep.subr.bf16.mxu0 %v602
    %661 = vmatpush1.bf16.msra.mxu0 %v601
    %662 = vmatprep.subr.bf16.mxu0 %v606
    %663 = vmatpush1.bf16.msra.mxu0 %v605
    %664 = vmatprep.subr.bf16.mxu0 0
    %665 = vmatpush1.bf16.msra.mxu0 0
    %666 = vmatprep.subr.bf16.mxu0 0
    %667 = vmatpush1.bf16.msra.mxu0 0
    %668 = vmatprep.subr.bf16.mxu0 0
    %669 = vmatpush1.bf16.msra.mxu0 0
    %670 = vmatprep.subr.bf16.mxu0 0
    %671 = vmatpush1.bf16.msra.mxu0 0
    %672 = vmatprep.subr.bf16.mxu0 0
    %673 = vmatpush1.bf16.msra.mxu0 0
    %674 = vmatprep.subr.bf16.mxu0 0
    %675 = vmatpush1.bf16.msra.mxu0 0
    %676 = vmatprep.subr.bf16.mxu0 0
    %677 = vmatpush1.bf16.msra.mxu0 0
    %678 = vmatprep.subr.bf16.mxu0 0
    %679 = vmatpush1.bf16.msra.mxu0 0
    %680 = vmatprep.subr.bf16.mxu0 0
    %681 = vmatpush1.bf16.msra.mxu0 0
    %682 = vmatprep.subr.bf16.mxu0 0
    %683 = vmatpush1.bf16.msra.mxu0 0
    %684 = vmatprep.subr.bf16.mxu0 0
    %685 = vmatpush1.bf16.msra.mxu0 0
    %686 = vmatprep.subr.bf16.mxu0 0
    %687 = vmatpush1.bf16.msra.mxu0 0
    %688 = vmatprep.subr.bf16.mxu0 0
    %689 = vmatpush1.bf16.msra.mxu0 0
    %690 = vmatprep.subr.bf16.mxu0 0
    %691 = vmatpush1.bf16.msra.mxu0 0
    %692 = vmatprep.mubr.bf16.mxu0 0
    %693 = vmatmul.mubr.bf16.gmra.mrb[0].mxu0 %v222
    %v694 = vpop.f32.mrb[0].mxu0
    %v695 = vadd.f32 0.0, %v694
    %v696 = vpop.f32.mrb[0].mxu0
    %v697 = vadd.f32 0.0, %v696
    %v698 = vpop.f32.mrb[0].mxu0
    %v699 = vadd.f32 0.0, %v698
    %v700 = vpop.f32.mrb[0].mxu0
    %v701 = vadd.f32 0.0, %v700
    %702 = vmatprep.mubr.bf16.mxu0 0
    %703 = vmatmul.mubr.bf16.gmra.mrb[0].mxu0 %v225
    %v704 = vpop.f32.mrb[0].mxu0
    %v705 = vadd.f32 0.0, %v704
    %v706 = vpop.f32.mrb[0].mxu0
    %v707 = vadd.f32 0.0, %v706
    %v708 = vpop.f32.mrb[0].mxu0
    %v709 = vadd.f32 0.0, %v708
    %v710 = vpop.f32.mrb[0].mxu0
    %v711 = vadd.f32 0.0, %v710
    %712 = vdwg.mxu0
    %v713 = vmax.f32 %v642, 0.0
    %v714 = vmax.f32 %v644, 0.0
    %v715 = vmax.f32 %v695, 0.0
    %v716 = vmax.f32 %v697, 0.0
    %v717 = vmax.f32 %v646, 0.0
    %v718 = vmax.f32 %v648, 0.0
    %v719 = vmax.f32 %v699, 0.0
    %v720 = vmax.f32 %v701, 0.0
    %v721 = vmax.f32 %v652, 0.0
    %v722 = vmax.f32 %v654, 0.0
    %v723 = vmax.f32 %v705, 0.0
    %v724 = vmax.f32 %v707, 0.0
    %v725 = vmax.f32 %v656, 0.0
    %v726 = vmax.f32 %v658, 0.0
    %v727 = vmax.f32 %v709, 0.0
    %v728 = vmax.f32 %v711, 0.0
    %v729 = vpack.c.bf16 %v717, %v713
    %v730 = vpack.c.bf16 %v718, %v714
    %v731 = vpack.c.bf16 %v719, %v715
    %v732 = vpack.c.bf16 %v720, %v716
    %v733 = vpack.c.bf16 %v725, %v721
    %v734 = vpack.c.bf16 %v726, %v722
    %v735 = vpack.c.bf16 %v727, %v723
    %v736 = vpack.c.bf16 %v728, %v724
    %737 = vmatprep.subr.bf16.mxu0 %v730
    %738 = vmatpush1.bf16.msra.mxu0 %v729
    %739 = vmatprep.subr.bf16.mxu0 %v734
    %740 = vmatpush1.bf16.msra.mxu0 %v733
    %741 = vmatprep.subr.bf16.mxu0 0
    %742 = vmatpush1.bf16.msra.mxu0 0
    %743 = vmatprep.subr.bf16.mxu0 0
    %744 = vmatpush1.bf16.msra.mxu0 0
    %745 = vmatprep.subr.bf16.mxu0 0
    %746 = vmatpush1.bf16.msra.mxu0 0
    %747 = vmatprep.subr.bf16.mxu0 0
    %748 = vmatpush1.bf16.msra.mxu0 0
    %749 = vmatprep.subr.bf16.mxu0 0
    %750 = vmatpush1.bf16.msra.mxu0 0
    %751 = vmatprep.subr.bf16.mxu0 0
    %752 = vmatpush1.bf16.msra.mxu0 0
    %753 = vmatprep.subr.bf16.mxu0 0
    %754 = vmatpush1.bf16.msra.mxu0 0
    %755 = vmatprep.subr.bf16.mxu0 0
    %756 = vmatpush1.bf16.msra.mxu0 0
    %757 = vmatprep.subr.bf16.mxu0 0
    %758 = vmatpush1.bf16.msra.mxu0 0
    %759 = vmatprep.subr.bf16.mxu0 0
    %760 = vmatpush1.bf16.msra.mxu0 0
    %761 = vmatprep.subr.bf16.mxu0 0
    %762 = vmatpush1.bf16.msra.mxu0 0
    %763 = vmatprep.subr.bf16.mxu0 0
    %764 = vmatpush1.bf16.msra.mxu0 0
    %765 = vmatprep.subr.bf16.mxu0 0
    %766 = vmatpush1.bf16.msra.mxu0 0
    %767 = vmatprep.subr.bf16.mxu0 0
    %768 = vmatpush1.bf16.msra.mxu0 0
    %769 = vmatprep.mubr.bf16.mxu0 0
    %770 = vmatmul.mubr.bf16.gmra.mrb[0].mxu0 %v358
    %v771 = vpop.f32.mrb[0].mxu0
    %v772 = vadd.f32 0.0, %v771
    %v773 = vpop.f32.mrb[0].mxu0
    %v774 = vadd.f32 0.0, %v773
    %v775 = vpop.f32.mrb[0].mxu0
    %v776 = vpop.f32.mrb[0].mxu0
    %777 = vdwg.mxu0
    %778 = vmatprep.subr.bf16.mxu0 %v732
    %779 = vmatpush1.bf16.msra.mxu0 %v731
    %780 = vmatprep.subr.bf16.mxu0 %v736
    %781 = vmatpush1.bf16.msra.mxu0 %v735
    %782 = vmatprep.subr.bf16.mxu0 0
    %783 = vmatpush1.bf16.msra.mxu0 0
    %784 = vmatprep.subr.bf16.mxu0 0
    %785 = vmatpush1.bf16.msra.mxu0 0
    %786 = vmatprep.subr.bf16.mxu0 0
    %787 = vmatpush1.bf16.msra.mxu0 0
    %788 = vmatprep.subr.bf16.mxu0 0
    %789 = vmatpush1.bf16.msra.mxu0 0
    %790 = vmatprep.subr.bf16.mxu0 0
    %791 = vmatpush1.bf16.msra.mxu0 0
    %792 = vmatprep.subr.bf16.mxu0 0
    %793 = vmatpush1.bf16.msra.mxu0 0
    %794 = vmatprep.subr.bf16.mxu0 0
    %795 = vmatpush1.bf16.msra.mxu0 0
    %796 = vmatprep.subr.bf16.mxu0 0
    %797 = vmatpush1.bf16.msra.mxu0 0
    %798 = vmatprep.subr.bf16.mxu0 0
    %799 = vmatpush1.bf16.msra.mxu0 0
    %800 = vmatprep.subr.bf16.mxu0 0
    %801 = vmatpush1.bf16.msra.mxu0 0
    %802 = vmatprep.subr.bf16.mxu0 0
    %803 = vmatpush1.bf16.msra.mxu0 0
    %804 = vmatprep.subr.bf16.mxu0 0
    %805 = vmatpush1.bf16.msra.mxu0 0
    %806 = vmatprep.subr.bf16.mxu0 0
    %807 = vmatpush1.bf16.msra.mxu0 0
    %808 = vmatprep.subr.bf16.mxu0 0
    %809 = vmatpush1.bf16.msra.mxu0 0
    %810 = vmatprep.mubr.bf16.mxu0 0
    %811 = vmatmul.mubr.bf16.gmra.mrb[0].mxu0 %v358
    %v812 = vpop.f32.mrb[0].mxu0
    %v813 = vadd.f32 0.0, %v812
    %v814 = vpop.f32.mrb[0].mxu0
    %v815 = vadd.f32 0.0, %v814
    %v816 = vpop.f32.mrb[0].mxu0
    %v817 = vpop.f32.mrb[0].mxu0
    %818 = vdwg.mxu0
    %v819 = vmax.f32 %v772, -0.95
    %v820 = vmax.f32 %v774, -0.95
    %v821 = vmax.f32 %v813, -0.95
    %v822 = vmax.f32 %v815, -0.95
    %v823 = vmin.f32 %v819, 0.95
    %v824 = vmin.f32 %v820, 0.95
    %v825 = vmin.f32 %v821, 0.95
    %v826 = vmin.f32 %v822, 0.95
    %v831 = vcombine.low %v823, %v824
    %v832 = vcombine.low %v825, %v826
    %s835 = scalar_lea.vmem [#allocation2], 16
    %836 = vst [vmem:[%s835] sm:$0x77] %v831
    %837 = vst [vmem:[%s835 + $0x8] sm:$0x77] %v832
    // Predicated region
    $region18: #{tpu_custom_call.1} parent=1 // pred_check
      _
    $region19: #{tpu_custom_call.1} parent=1 // pred_check_branch
      %839 = sbr.rel (0) target = $region21
    $region20: #{tpu_custom_call.1} parent=1 // pred_region
      %s841 = ssub.s32 512, 512
      %842 = vsyncadd [#allocation3], %s841
      %s844 = sshll.u32 [#allocation2], 4
      %s845 = int_to_ptr.vmem [resolvable:$true] %s844
      %847 = dma.vmem_to_hbm [thread:$0]  %s845, 512, %s4, [#allocation3]
    $region21: #{tpu_custom_call.1} parent=1 // pred_fallthru
      _
    // Predicated region
    $region22: #{tpu_custom_call.1} parent=1 // pred_check
      _
    $region23: #{tpu_custom_call.1} parent=1 // pred_check_branch
      %849 = sbr.rel (0) target = $region25
    $region24: #{tpu_custom_call.1} parent=1 // pred_region
      %850 = dma.done [#allocation3], 512
    $region25: #{tpu_custom_call.1} parent=1 // pred_fallthru
      _
    %851 = vsyncpa [#allocation3], 1

</llo_original>
